<compile_context>
chip_gen: v7x
topology: tpu7x:2x2x1
jax: 0.10.0
libtpu: 0.0.40
codegen_flags: <defaults>
</compile_context>

<pallas_src>
import functools

import jax
import jax.numpy as jnp
import numpy as np
from jax.experimental import pallas as pl
from jax.experimental.pallas import tpu as pltpu


def _round_up(x, m):
    return (x + m - 1) // m * m


# ----------------------------------------------------------------------------
# One-time parameter packing (load time, NOT in the per-call forward path).
#   weights[i]: (out_i, in_i)  -- PyTorch nn.Linear layout (kept as-is)
#   biases[i] : (out_i,)
# Packed buffer layout (f32, zero padded):
#   rows  [row_offs[i] : row_offs[i]+out_i), cols [0 : in_i)          -> W_i
#   rows  [row_offs[i] : row_offs[i]+out_i), col  bias_col            -> b_i
# row_offs are 8-aligned (sublane), bias_col is 128-aligned (lane).
# ----------------------------------------------------------------------------
def pack_trajectory_head_params(weights, biases):
    dims = (int(weights[0].shape[1]),) + tuple(int(w.shape[0]) for w in weights)
    n = len(weights)
    bias_col = _round_up(max(dims[:-1]), 128)      # lane-padded weight columns
    n_cols = bias_col + 128                        # +1 lane-block for biases
    row_offs, off = [], 0
    for i in range(n):
        row_offs.append(off)
        off += _round_up(dims[i + 1], 8)           # 8-aligned row offsets
    n_rows = _round_up(max(off, 8), 8)

    buf = np.zeros((n_rows, n_cols), np.float32)
    for i, (w, b) in enumerate(zip(weights, biases)):
        r = row_offs[i]
        buf[r:r + dims[i + 1], :dims[i]] = np.asarray(w, np.float32)
        buf[r:r + dims[i + 1], bias_col] = np.asarray(b, np.float32)

    meta = dict(dims=dims, row_offs=tuple(row_offs), bias_col=bias_col)
    return jnp.asarray(buf), meta


# ----------------------------------------------------------------------------
# Fused MLP kernel, (features, batch) layout.
#   x_ref : (d0, TB)      -- batch on the lane axis
#   p_ref : packed params -- VMEM-resident across all grid steps
#   o_ref : (d_last, TB)  -- lane-dense output store
# ----------------------------------------------------------------------------
def _mlp_kernel(x_ref, p_ref, o_ref, *, dims, row_offs, bias_col):
    h = x_ref[...]                                          # (d0, TB), stays in vregs
    n_layers = len(dims) - 1
    for i in range(n_layers):                               # static unroll over layers
        r, din, dout = row_offs[i], dims[i], dims[i + 1]
        w = p_ref[r:r + dout, 0:din]                        # (dout, din), native (out,in)
        b = p_ref[r:r + dout, bias_col:bias_col + 1]        # (dout, 1), lane-broadcast
        h = jnp.dot(w, h, preferred_element_type=jnp.float32) + b
        if i < n_layers - 1:                                # ReLU on all but last layer
            h = jnp.maximum(h, 0.0)
    o_ref[...] = h                                          # (d_last, TB) full-width store


# ----------------------------------------------------------------------------
# Jitted forward.  Only layout plumbing (transpose / batch pad) happens here;
# all parameter prep was done once in pack_trajectory_head_params.
# ----------------------------------------------------------------------------
@functools.partial(jax.jit, static_argnames=("dims", "row_offs", "bias_col"))
def _trajectory_head_forward(x, packed, dims, row_offs, bias_col):
    B = x.shape[0]
    d0, d_last = dims[0], dims[-1]

    TB = min(512, _round_up(max(B, 1), 128))     # batch tile (lane axis), >=128
    B_pad = _round_up(B, TB)

    # Layout plumbing: batch -> lane axis, pad batch to a multiple of TB.
    xt = jnp.transpose(x.astype(jnp.float32))    # (d0, B)
    if B_pad != B:
        xt = jnp.pad(xt, ((0, 0), (0, B_pad - B)))

    n_layers = len(dims) - 1
    flops = 2 * B_pad * sum(dims[i] * dims[i + 1] for i in range(n_layers))
    bytes_accessed = 4 * (d0 * B_pad + packed.size + d_last * B_pad)

    kernel = functools.partial(_mlp_kernel, dims=dims, row_offs=row_offs,
                               bias_col=bias_col)

    out_t = pl.pallas_call(
        kernel,
        out_shape=jax.ShapeDtypeStruct((d_last, B_pad), jnp.float32),
        grid=(B_pad // TB,),
        in_specs=[
            pl.BlockSpec((d0, TB), lambda i: (0, i)),        # batch tile of x
            pl.BlockSpec(packed.shape, lambda i: (0, 0)),    # params: single DMA, resident
        ],
        out_specs=pl.BlockSpec((d_last, TB), lambda i: (0, i)),
        compiler_params=pltpu.CompilerParams(
            dimension_semantics=("parallel",),               # both TCs on v7x
        ),
        cost_estimate=pl.CostEstimate(flops=flops, transcendentals=0,
                                      bytes_accessed=bytes_accessed),
    )(xt, packed)

    return jnp.transpose(out_t[:, :B])            # back to (B, d_last)


class TrajectoryHeadPallas:
    """Holds the packed parameters; __call__ runs the fused Pallas forward."""

    def __init__(self, weights, biases):
        self.packed, meta = pack_trajectory_head_params(weights, biases)
        self.dims = meta["dims"]
        self.row_offs = meta["row_offs"]
        self.bias_col = meta["bias_col"]

    def __call__(self, x):
        return _trajectory_head_forward(x, self.packed, self.dims,
                                        self.row_offs, self.bias_col)


# ----------------------------------------------------------------------------
# Pure-JAX reference (mirrors the PyTorch module exactly)
# ----------------------------------------------------------------------------
def reference_forward(x, weights, biases):
    h = x
    n = len(weights)
    for i, (w, b) in enumerate(zip(weights, biases)):
        h = h @ w.T + b
        if i < n - 1:
            h = jnp.maximum(h, 0.0)
    return h


if __name__ == "__main__":
    # TrajectoryHead(dims=[32, 64, 64, 16]):
    #   Linear(32,64)+ReLU, Linear(64,64)+ReLU, Linear(64,16)
    dims = [32, 64, 64, 16]
    B = 2

    key = jax.random.PRNGKey(0)
    n_lin = len(dims) - 1
    keys = jax.random.split(key, 1 + 2 * n_lin)

    x = jax.random.normal(keys[0], (B, dims[0]), dtype=jnp.float32)

    # Deterministic Linear params (PyTorch-style uniform bounds: 1/sqrt(fan_in))
    weights, biases = [], []
    for i in range(n_lin):
        bound = 1.0 / np.sqrt(dims[i])
        w = jax.random.uniform(keys[1 + 2 * i], (dims[i + 1], dims[i]),
                               minval=-bound, maxval=bound, dtype=jnp.float32)
        b = jax.random.uniform(keys[2 + 2 * i], (dims[i + 1],),
                               minval=-bound, maxval=bound, dtype=jnp.float32)
        weights.append(w)
        biases.append(b)

    head = TrajectoryHeadPallas(weights, biases)   # params packed ONCE here
    out = jax.block_until_ready(head(x))

    ref = reference_forward(x, weights, biases)
    np.testing.assert_allclose(np.asarray(out), np.asarray(ref),
                               rtol=1e-4, atol=1e-5)
    assert out.shape == (B, dims[-1])

    print("KERNEL_OK")
</pallas_src>

<mosaic_0001>
module attributes {stable_mosaic.version = 11 : i64} {
  func.func @_mlp_kernel(%arg0: i32, %arg1: memref<32x128xf32, #tpu.memory_space<vmem>>, %arg2: memref<144x256xf32, #tpu.memory_space<vmem>>, %arg3: memref<16x128xf32, #tpu.memory_space<vmem>>) attributes {dimension_semantics = [#tpu.dimension_semantics<parallel>], iteration_bounds = array<i64: 1>, scalar_prefetch = 0 : i64, scratch_operands = 0 : i64, tpu.core_type = #tpu.core_type<tc>, window_params = [{transform_indices = @transform_0, window_bounds = array<i64: 32, 128>}, {pipeline_mode = #tpu.pipeline_mode<synchronous>, transform_indices = @transform_1, window_bounds = array<i64: 144, 256>}, {transform_indices = @transform_2, window_bounds = array<i64: 16, 128>}]} {
    %c0 = arith.constant 0 : index
    %c0_0 = arith.constant 0 : index
    %0 = vector.load %arg1[%c0, %c0_0] : memref<32x128xf32, #tpu.memory_space<vmem>>, vector<32x128xf32>
    %c0_1 = arith.constant 0 : index
    %c0_2 = arith.constant 0 : index
    %1 = vector.load %arg2[%c0_1, %c0_2] : memref<144x256xf32, #tpu.memory_space<vmem>>, vector<64x32xf32>
    %c0_3 = arith.constant 0 : index
    %c128 = arith.constant 128 : index
    %2 = vector.load %arg2[%c0_3, %c128] : memref<144x256xf32, #tpu.memory_space<vmem>>, vector<64x1xf32>
    %cst = arith.constant dense<0.000000e+00> : vector<64x128xf32>
    %3 = tpu.matmul %1, %0, %cst {dimension_numbers = #tpu.dot_dimension_numbers<[1], [0], [0], [1], [0, 0, 1, 1], [], []>} : vector<64x32xf32>, vector<32x128xf32>, vector<64x128xf32> -> vector<64x128xf32>
    %4 = vector.broadcast %2 : vector<64x1xf32> to vector<64x128xf32>
    %5 = arith.addf %3, %4 : vector<64x128xf32>
    %cst_4 = arith.constant 0.000000e+00 : f32
    %6 = vector.broadcast %cst_4 : f32 to vector<64x128xf32>
    %7 = arith.maximumf %5, %6 : vector<64x128xf32>
    %c64 = arith.constant 64 : index
    %c0_5 = arith.constant 0 : index
    %8 = vector.load %arg2[%c64, %c0_5] : memref<144x256xf32, #tpu.memory_space<vmem>>, vector<64x64xf32>
    %c64_6 = arith.constant 64 : index
    %c128_7 = arith.constant 128 : index
    %9 = vector.load %arg2[%c64_6, %c128_7] : memref<144x256xf32, #tpu.memory_space<vmem>>, vector<64x1xf32>
    %cst_8 = arith.constant dense<0.000000e+00> : vector<64x128xf32>
    %10 = tpu.matmul %8, %7, %cst_8 {dimension_numbers = #tpu.dot_dimension_numbers<[1], [0], [0], [1], [0, 0, 1, 1], [], []>} : vector<64x64xf32>, vector<64x128xf32>, vector<64x128xf32> -> vector<64x128xf32>
    %11 = vector.broadcast %9 : vector<64x1xf32> to vector<64x128xf32>
    %12 = arith.addf %10, %11 : vector<64x128xf32>
    %cst_9 = arith.constant 0.000000e+00 : f32
    %13 = vector.broadcast %cst_9 : f32 to vector<64x128xf32>
    %14 = arith.maximumf %12, %13 : vector<64x128xf32>
    %c128_10 = arith.constant 128 : index
    %c0_11 = arith.constant 0 : index
    %15 = vector.load %arg2[%c128_10, %c0_11] : memref<144x256xf32, #tpu.memory_space<vmem>>, vector<16x64xf32>
    %c128_12 = arith.constant 128 : index
    %c128_13 = arith.constant 128 : index
    %16 = vector.load %arg2[%c128_12, %c128_13] : memref<144x256xf32, #tpu.memory_space<vmem>>, vector<16x1xf32>
    %cst_14 = arith.constant dense<0.000000e+00> : vector<16x128xf32>
    %17 = tpu.matmul %15, %14, %cst_14 {dimension_numbers = #tpu.dot_dimension_numbers<[1], [0], [0], [1], [0, 0, 1, 1], [], []>} : vector<16x64xf32>, vector<64x128xf32>, vector<16x128xf32> -> vector<16x128xf32>
    %18 = vector.broadcast %16 : vector<16x1xf32> to vector<16x128xf32>
    %19 = arith.addf %17, %18 : vector<16x128xf32>
    %c0_15 = arith.constant 0 : index
    %c0_16 = arith.constant 0 : index
    %20 = vector.load %arg3[%c0_15, %c0_16] : memref<16x128xf32, #tpu.memory_space<vmem>>, vector<16x128xf32>
    tpu.vector_store %arg3[%c0_15, %c0_16], %19 {strides = array<i32>} : memref<16x128xf32, #tpu.memory_space<vmem>>, vector<16x128xf32>,
    return
  }
  func.func @transform_0(%arg0: i32) -> (i32, i32) {
    %c0_i32 = arith.constant 0 : i32
    %c0_i32_0 = arith.constant 0 : i32
    return %c0_i32, %arg0 : i32, i32
  }
  func.func @transform_1(%arg0: i32) -> (i32, i32) {
    %c0_i32 = arith.constant 0 : i32
    %c0_i32_0 = arith.constant 0 : i32
    %c0_i32_1 = arith.constant 0 : i32
    return %c0_i32, %c0_i32_0 : i32, i32
  }
  func.func @transform_2(%arg0: i32) -> (i32, i32) {
    %c0_i32 = arith.constant 0 : i32
    %c0_i32_0 = arith.constant 0 : i32
    return %c0_i32, %arg0 : i32, i32
  }
}

</mosaic_0001>

<llo_original>
// kernel: _trajectory_head_forward.1
$region0: #{_trajectory_head_forward.1}
  #allocation0 [shape = 'u32[]', space=smem, size = 0x4, offset = 0x4, fixed_abs, tag = 'smem constant byte address 0x4 - core index']
  #allocation1 [shape = 'u32[144,128]{1,0:T(1,128)}', space=vmem, size = 0x12000, scoped, tag = 'internal scratch']
  %s0 = inlined_call_operand.vmem [shape: f32[32,128], index: 0, kind: input, shape index: {}]
  %s1 = inlined_call_operand.hbm [shape: f32[144,256], index: 1, kind: input, shape index: {}]
  %s2 = inlined_call_operand.vmem [shape: f32[16,128], index: 2, kind: output, shape index: {}]
  %s3 = sld [smem:[#allocation0]]
  $region22: #{_trajectory_head_forward.1} parent=0
    _
  %s5 = ssub.s32 1, %s3
  %s6 = scalar_select 0, %s5, %s3
  $region1: #{_trajectory_head_forward.1} parent=0
    #allocation2 [shape = 'u8[147456]{0}', space=vmem, size = 0x24000, scoped, tag = 'input window, operand 1, single buffered']
    #allocation3 [shape = 's32[1]{0}', space=sflag, size = 0x4, scoped, tag = 'scoped memory for _trajectory_head_forward.1']
    %7 = vsyncpa [#allocation3], 0
    // Predicated region
    $region2: #{_trajectory_head_forward.1} parent=1 // pred_check
      _
    $region3: #{_trajectory_head_forward.1} parent=1 // pred_check_branch
      %9 = sbr.rel (0) target = $region5
    $region4: #{_trajectory_head_forward.1} parent=1 // pred_region
      _
    $region5: #{_trajectory_head_forward.1} parent=1 // pred_fallthru
      _
    // Predicated region
    $region6: #{_trajectory_head_forward.1} parent=1 // pred_check
      _
    $region7: #{_trajectory_head_forward.1} parent=1 // pred_check_branch
      %11 = sbr.rel (0) target = $region9
    $region8: #{_trajectory_head_forward.1} parent=1 // pred_region
      %s13 = ssub.s32 4608, 4608
      %14 = vsyncadd [#allocation3], %s13
      %s15 = sshll.u32 [#allocation2], 4
      %s16 = int_to_ptr.vmem [resolvable:$true] %s15
      %21 = dma.hbm_to_vmem [thread:$0]  %s1, 4608, %s16, [#allocation3], 256, 256, 16
    $region9: #{_trajectory_head_forward.1} parent=1 // pred_fallthru
      _
    // Predicated region
    $region10: #{_trajectory_head_forward.1} parent=1 // pred_check
      _
    $region11: #{_trajectory_head_forward.1} parent=1 // pred_check_branch
      %23 = sbr.rel (0) target = $region13
    $region12: #{_trajectory_head_forward.1} parent=1 // pred_region
      %24 = dma.done [#allocation3], 4608
    $region13: #{_trajectory_head_forward.1} parent=1 // pred_fallthru
      _
    %v25 = vld [vmem:[%s0] sm:$0xff]
    %v26 = vld [vmem:[%s0 + $0x8] sm:$0xff]
    %v27 = vld [vmem:[%s0 + $0x10] sm:$0xff]
    %v28 = vld [vmem:[%s0 + $0x18] sm:$0xff]
    %v29 = vld [vmem:[#allocation2] sm:$0xff]
    %v30 = vld [vmem:[#allocation2 + $0x10] sm:$0xff]
    %v31 = vld [vmem:[#allocation2 + $0x20] sm:$0xff]
    %v32 = vld [vmem:[#allocation2 + $0x30] sm:$0xff]
    %v33 = vld [vmem:[#allocation2 + $0x40] sm:$0xff]
    %v34 = vld [vmem:[#allocation2 + $0x50] sm:$0xff]
    %v35 = vld [vmem:[#allocation2 + $0x60] sm:$0xff]
    %v36 = vld [vmem:[#allocation2 + $0x70] sm:$0xff]
    %v37 = vld [vmem:[#allocation2 + $0x8] sm:$0xff]
    %v38 = vld [vmem:[#allocation2 + $0x18] sm:$0xff]
    %v39 = vld [vmem:[#allocation2 + $0x28] sm:$0xff]
    %v40 = vld [vmem:[#allocation2 + $0x38] sm:$0xff]
    %v41 = vld [vmem:[#allocation2 + $0x48] sm:$0xff]
    %v42 = vld [vmem:[#allocation2 + $0x58] sm:$0xff]
    %v43 = vld [vmem:[#allocation2 + $0x68] sm:$0xff]
    %v44 = vld [vmem:[#allocation2 + $0x78] sm:$0xff]
    %46 = vset.pattern.permute.xlu0 0
    %47 = vperm.xlu0 %46, %v37
    %v48 = vpop.permute.xlu0 %47
    %51 = vset.pattern.permute.xlu0 0
    %52 = vperm.xlu0 %51, %v38
    %v53 = vpop.permute.xlu0 %52
    %56 = vset.pattern.permute.xlu0 0
    %57 = vperm.xlu0 %56, %v39
    %v58 = vpop.permute.xlu0 %57
    %61 = vset.pattern.permute.xlu0 0
    %62 = vperm.xlu0 %61, %v40
    %v63 = vpop.permute.xlu0 %62
    %66 = vset.pattern.permute.xlu0 0
    %67 = vperm.xlu0 %66, %v41
    %v68 = vpop.permute.xlu0 %67
    %71 = vset.pattern.permute.xlu0 0
    %72 = vperm.xlu0 %71, %v42
    %v73 = vpop.permute.xlu0 %72
    %76 = vset.pattern.permute.xlu0 0
    %77 = vperm.xlu0 %76, %v43
    %v78 = vpop.permute.xlu0 %77
    %81 = vset.pattern.permute.xlu0 0
    %82 = vperm.xlu0 %81, %v44
    %v83 = vpop.permute.xlu0 %82
    %vm85 = vcmask 261120
    %v87 = vsel %vm85, %v29, 0
    %v90 = vsel %vm85, %v30, 0
    %v93 = vsel %vm85, %v31, 0
    %v96 = vsel %vm85, %v32, 0
    %v99 = vsel %vm85, %v33, 0
    %v102 = vsel %vm85, %v34, 0
    %v105 = vsel %vm85, %v35, 0
    %v108 = vsel %vm85, %v36, 0
    %110 = vmatprep.subr.mxu0 0.0
    %111 = vmatpush1.msra.mxu0 %v25
    %112 = vmatprep.subr.mxu0 0.0
    %113 = vmatpush1.msra.mxu0 %v26
    %114 = vmatprep.subr.mxu0 0.0
    %115 = vmatpush1.msra.mxu0 %v27
    %116 = vmatprep.subr.mxu0 0.0
    %117 = vmatpush1.msra.mxu0 %v28
    %118 = vmatprep.subr.mxu0 0.0
    %119 = vmatpush1.msra.mxu0 0.0
    %120 = vmatprep.subr.mxu0 0.0
    %121 = vmatpush1.msra.mxu0 0.0
    %122 = vmatprep.subr.mxu0 0.0
    %123 = vmatpush1.msra.mxu0 0.0
    %124 = vmatprep.subr.mxu0 0.0
    %125 = vmatpush1.msra.mxu0 0.0
    %126 = vmatprep.subr.mxu0 0.0
    %127 = vmatpush1.msra.mxu0 0.0
    %128 = vmatprep.subr.mxu0 0.0
    %129 = vmatpush1.msra.mxu0 0.0
    %130 = vmatprep.subr.mxu0 0.0
    %131 = vmatpush1.msra.mxu0 0.0
    %132 = vmatprep.subr.mxu0 0.0
    %133 = vmatpush1.msra.mxu0 0.0
    %134 = vmatprep.subr.mxu0 0.0
    %135 = vmatpush1.msra.mxu0 0.0
    %136 = vmatprep.subr.mxu0 0.0
    %137 = vmatpush1.msra.mxu0 0.0
    %138 = vmatprep.subr.mxu0 0.0
    %139 = vmatpush1.msra.mxu0 0.0
    %140 = vmatprep.subr.mxu0 0.0
    %141 = vmatpush1.msra.mxu0 0.0
    %142 = vmatprep.subr.mxu0 0.0
    %143 = vmatpush1.msra.mxu0 0.0
    %144 = vmatprep.subr.mxu0 0.0
    %145 = vmatpush1.msra.mxu0 0.0
    %146 = vmatprep.subr.mxu0 0.0
    %147 = vmatpush1.msra.mxu0 0.0
    %148 = vmatprep.subr.mxu0 0.0
    %149 = vmatpush1.msra.mxu0 0.0
    %150 = vmatprep.subr.mxu0 0.0
    %151 = vmatpush1.msra.mxu0 0.0
    %152 = vmatprep.subr.mxu0 0.0
    %153 = vmatpush1.msra.mxu0 0.0
    %154 = vmatprep.subr.mxu0 0.0
    %155 = vmatpush1.msra.mxu0 0.0
    %156 = vmatprep.subr.mxu0 0.0
    %157 = vmatpush1.msra.mxu0 0.0
    %158 = vmatprep.subr.mxu0 0.0
    %159 = vmatpush1.msra.mxu0 0.0
    %160 = vmatprep.subr.mxu0 0.0
    %161 = vmatpush1.msra.mxu0 0.0
    %162 = vmatprep.subr.mxu0 0.0
    %163 = vmatpush1.msra.mxu0 0.0
    %164 = vmatprep.subr.mxu0 0.0
    %165 = vmatpush1.msra.mxu0 0.0
    %166 = vmatprep.subr.mxu0 0.0
    %167 = vmatpush1.msra.mxu0 0.0
    %168 = vmatprep.subr.mxu0 0.0
    %169 = vmatpush1.msra.mxu0 0.0
    %170 = vmatprep.subr.mxu0 0.0
    %171 = vmatpush1.msra.mxu0 0.0
    %172 = vmatprep.subr.mxu0 0.0
    %173 = vmatpush1.msra.mxu0 0.0
    %174 = vmatprep.mubr.f32.mxu0 0.0
    %175 = vmatmul.mubr.f32.gmra.mrb[0].mxu0 %v87
    %v176 = vpop.f32.mrb[0].mxu0
    %v177 = vadd.f32 %v48, %v176
    %v178 = vpop.f32.mrb[0].mxu0
    %179 = vmatprep.mubr.f32.mxu0 0.0
    %180 = vmatmul.mubr.f32.gmra.mrb[0].mxu0 %v90
    %v181 = vpop.f32.mrb[0].mxu0
    %v182 = vadd.f32 %v53, %v181
    %v183 = vpop.f32.mrb[0].mxu0
    %184 = vmatprep.mubr.f32.mxu0 0.0
    %185 = vmatmul.mubr.f32.gmra.mrb[0].mxu0 %v93
    %v186 = vpop.f32.mrb[0].mxu0
    %v187 = vadd.f32 %v58, %v186
    %v188 = vpop.f32.mrb[0].mxu0
    %189 = vmatprep.mubr.f32.mxu0 0.0
    %190 = vmatmul.mubr.f32.gmra.mrb[0].mxu0 %v96
    %v191 = vpop.f32.mrb[0].mxu0
    %v192 = vadd.f32 %v63, %v191
    %v193 = vpop.f32.mrb[0].mxu0
    %194 = vmatprep.mubr.f32.mxu0 0.0
    %195 = vmatmul.mubr.f32.gmra.mrb[0].mxu0 %v99
    %v196 = vpop.f32.mrb[0].mxu0
    %v197 = vadd.f32 %v68, %v196
    %v198 = vpop.f32.mrb[0].mxu0
    %199 = vmatprep.mubr.f32.mxu0 0.0
    %200 = vmatmul.mubr.f32.gmra.mrb[0].mxu0 %v102
    %v201 = vpop.f32.mrb[0].mxu0
    %v202 = vadd.f32 %v73, %v201
    %v203 = vpop.f32.mrb[0].mxu0
    %204 = vmatprep.mubr.f32.mxu0 0.0
    %205 = vmatmul.mubr.f32.gmra.mrb[0].mxu0 %v105
    %v206 = vpop.f32.mrb[0].mxu0
    %v207 = vadd.f32 %v78, %v206
    %v208 = vpop.f32.mrb[0].mxu0
    %209 = vmatprep.mubr.f32.mxu0 0.0
    %210 = vmatmul.mubr.f32.gmra.mrb[0].mxu0 %v108
    %v211 = vpop.f32.mrb[0].mxu0
    %v212 = vadd.f32 %v83, %v211
    %v213 = vpop.f32.mrb[0].mxu0
    %214 = vdwg.mxu0
    %v215 = vmax.f32 %v177, 0.0
    %v216 = vmax.f32 %v182, 0.0
    %v217 = vmax.f32 %v187, 0.0
    %v218 = vmax.f32 %v192, 0.0
    %v219 = vmax.f32 %v197, 0.0
    %v220 = vmax.f32 %v202, 0.0
    %v221 = vmax.f32 %v207, 0.0
    %v222 = vmax.f32 %v212, 0.0
    %v223 = vld [vmem:[#allocation2 + $0x80] sm:$0xff]
    %v224 = vld [vmem:[#allocation2 + $0x90] sm:$0xff]
    %v225 = vld [vmem:[#allocation2 + $0xa0] sm:$0xff]
    %v226 = vld [vmem:[#allocation2 + $0xb0] sm:$0xff]
    %v227 = vld [vmem:[#allocation2 + $0xc0] sm:$0xff]
    %v228 = vld [vmem:[#allocation2 + $0xd0] sm:$0xff]
    %v229 = vld [vmem:[#allocation2 + $0xe0] sm:$0xff]
    %v230 = vld [vmem:[#allocation2 + $0xf0] sm:$0xff]
    %v231 = vld [vmem:[#allocation2 + $0x88] sm:$0xff]
    %v232 = vld [vmem:[#allocation2 + $0x98] sm:$0xff]
    %v233 = vld [vmem:[#allocation2 + $0xa8] sm:$0xff]
    %v234 = vld [vmem:[#allocation2 + $0xb8] sm:$0xff]
    %v235 = vld [vmem:[#allocation2 + $0xc8] sm:$0xff]
    %v236 = vld [vmem:[#allocation2 + $0xd8] sm:$0xff]
    %v237 = vld [vmem:[#allocation2 + $0xe8] sm:$0xff]
    %v238 = vld [vmem:[#allocation2 + $0xf8] sm:$0xff]
    %240 = vset.pattern.permute.xlu0 0
    %241 = vperm.xlu0 %240, %v231
    %v242 = vpop.permute.xlu0 %241
    %245 = vset.pattern.permute.xlu0 0
    %246 = vperm.xlu0 %245, %v232
    %v247 = vpop.permute.xlu0 %246
    %250 = vset.pattern.permute.xlu0 0
    %251 = vperm.xlu0 %250, %v233
    %v252 = vpop.permute.xlu0 %251
    %255 = vset.pattern.permute.xlu0 0
    %256 = vperm.xlu0 %255, %v234
    %v257 = vpop.permute.xlu0 %256
    %260 = vset.pattern.permute.xlu0 0
    %261 = vperm.xlu0 %260, %v235
    %v262 = vpop.permute.xlu0 %261
    %265 = vset.pattern.permute.xlu0 0
    %266 = vperm.xlu0 %265, %v236
    %v267 = vpop.permute.xlu0 %266
    %270 = vset.pattern.permute.xlu0 0
    %271 = vperm.xlu0 %270, %v237
    %v272 = vpop.permute.xlu0 %271
    %275 = vset.pattern.permute.xlu0 0
    %276 = vperm.xlu0 %275, %v238
    %v277 = vpop.permute.xlu0 %276
    %vm279 = vcmask 523264
    %v281 = vsel %vm279, %v223, 0
    %v284 = vsel %vm279, %v224, 0
    %v287 = vsel %vm279, %v225, 0
    %v290 = vsel %vm279, %v226, 0
    %v293 = vsel %vm279, %v227, 0
    %v296 = vsel %vm279, %v228, 0
    %v299 = vsel %vm279, %v229, 0
    %v302 = vsel %vm279, %v230, 0
    %304 = vmatprep.subr.mxu0 0.0
    %305 = vmatpush1.msra.mxu0 %v215
    %306 = vmatprep.subr.mxu0 0.0
    %307 = vmatpush1.msra.mxu0 %v216
    %308 = vmatprep.subr.mxu0 0.0
    %309 = vmatpush1.msra.mxu0 %v217
    %310 = vmatprep.subr.mxu0 0.0
    %311 = vmatpush1.msra.mxu0 %v218
    %312 = vmatprep.subr.mxu0 0.0
    %313 = vmatpush1.msra.mxu0 %v219
    %314 = vmatprep.subr.mxu0 0.0
    %315 = vmatpush1.msra.mxu0 %v220
    %316 = vmatprep.subr.mxu0 0.0
    %317 = vmatpush1.msra.mxu0 %v221
    %318 = vmatprep.subr.mxu0 0.0
    %319 = vmatpush1.msra.mxu0 %v222
    %320 = vmatprep.subr.mxu0 0.0
    %321 = vmatpush1.msra.mxu0 0.0
    %322 = vmatprep.subr.mxu0 0.0
    %323 = vmatpush1.msra.mxu0 0.0
    %324 = vmatprep.subr.mxu0 0.0
    %325 = vmatpush1.msra.mxu0 0.0
    %326 = vmatprep.subr.mxu0 0.0
    %327 = vmatpush1.msra.mxu0 0.0
    %328 = vmatprep.subr.mxu0 0.0
    %329 = vmatpush1.msra.mxu0 0.0
    %330 = vmatprep.subr.mxu0 0.0
    %331 = vmatpush1.msra.mxu0 0.0
    %332 = vmatprep.subr.mxu0 0.0
    %333 = vmatpush1.msra.mxu0 0.0
    %334 = vmatprep.subr.mxu0 0.0
    %335 = vmatpush1.msra.mxu0 0.0
    %336 = vmatprep.subr.mxu0 0.0
    %337 = vmatpush1.msra.mxu0 0.0
    %338 = vmatprep.subr.mxu0 0.0
    %339 = vmatpush1.msra.mxu0 0.0
    %340 = vmatprep.subr.mxu0 0.0
    %341 = vmatpush1.msra.mxu0 0.0
    %342 = vmatprep.subr.mxu0 0.0
    %343 = vmatpush1.msra.mxu0 0.0
    %344 = vmatprep.subr.mxu0 0.0
    %345 = vmatpush1.msra.mxu0 0.0
    %346 = vmatprep.subr.mxu0 0.0
    %347 = vmatpush1.msra.mxu0 0.0
    %348 = vmatprep.subr.mxu0 0.0
    %349 = vmatpush1.msra.mxu0 0.0
    %350 = vmatprep.subr.mxu0 0.0
    %351 = vmatpush1.msra.mxu0 0.0
    %352 = vmatprep.subr.mxu0 0.0
    %353 = vmatpush1.msra.mxu0 0.0
    %354 = vmatprep.subr.mxu0 0.0
    %355 = vmatpush1.msra.mxu0 0.0
    %356 = vmatprep.subr.mxu0 0.0
    %357 = vmatpush1.msra.mxu0 0.0
    %358 = vmatprep.subr.mxu0 0.0
    %359 = vmatpush1.msra.mxu0 0.0
    %360 = vmatprep.subr.mxu0 0.0
    %361 = vmatpush1.msra.mxu0 0.0
    %362 = vmatprep.subr.mxu0 0.0
    %363 = vmatpush1.msra.mxu0 0.0
    %364 = vmatprep.subr.mxu0 0.0
    %365 = vmatpush1.msra.mxu0 0.0
    %366 = vmatprep.subr.mxu0 0.0
    %367 = vmatpush1.msra.mxu0 0.0
    %368 = vmatprep.mubr.f32.mxu0 0.0
    %369 = vmatmul.mubr.f32.gmra.mrb[0].mxu0 %v281
    %v370 = vpop.f32.mrb[0].mxu0
    %v371 = vadd.f32 %v242, %v370
    %v372 = vpop.f32.mrb[0].mxu0
    %373 = vmatprep.mubr.f32.mxu0 0.0
    %374 = vmatmul.mubr.f32.gmra.mrb[0].mxu0 %v284
    %v375 = vpop.f32.mrb[0].mxu0
    %v376 = vadd.f32 %v247, %v375
    %v377 = vpop.f32.mrb[0].mxu0
    %378 = vmatprep.mubr.f32.mxu0 0.0
    %379 = vmatmul.mubr.f32.gmra.mrb[0].mxu0 %v287
    %v380 = vpop.f32.mrb[0].mxu0
    %v381 = vadd.f32 %v252, %v380
    %v382 = vpop.f32.mrb[0].mxu0
    %383 = vmatprep.mubr.f32.mxu0 0.0
    %384 = vmatmul.mubr.f32.gmra.mrb[0].mxu0 %v290
    %v385 = vpop.f32.mrb[0].mxu0
    %v386 = vadd.f32 %v257, %v385
    %v387 = vpop.f32.mrb[0].mxu0
    %388 = vmatprep.mubr.f32.mxu0 0.0
    %389 = vmatmul.mubr.f32.gmra.mrb[0].mxu0 %v293
    %v390 = vpop.f32.mrb[0].mxu0
    %v391 = vadd.f32 %v262, %v390
    %v392 = vpop.f32.mrb[0].mxu0
    %393 = vmatprep.mubr.f32.mxu0 0.0
    %394 = vmatmul.mubr.f32.gmra.mrb[0].mxu0 %v296
    %v395 = vpop.f32.mrb[0].mxu0
    %v396 = vadd.f32 %v267, %v395
    %v397 = vpop.f32.mrb[0].mxu0
    %398 = vmatprep.mubr.f32.mxu0 0.0
    %399 = vmatmul.mubr.f32.gmra.mrb[0].mxu0 %v299
    %v400 = vpop.f32.mrb[0].mxu0
    %v401 = vadd.f32 %v272, %v400
    %v402 = vpop.f32.mrb[0].mxu0
    %403 = vmatprep.mubr.f32.mxu0 0.0
    %404 = vmatmul.mubr.f32.gmra.mrb[0].mxu0 %v302
    %v405 = vpop.f32.mrb[0].mxu0
    %v406 = vadd.f32 %v277, %v405
    %v407 = vpop.f32.mrb[0].mxu0
    %408 = vdwg.mxu0
    %v409 = vmax.f32 %v371, 0.0
    %v410 = vmax.f32 %v376, 0.0
    %v411 = vmax.f32 %v381, 0.0
    %v412 = vmax.f32 %v386, 0.0
    %v413 = vmax.f32 %v391, 0.0
    %v414 = vmax.f32 %v396, 0.0
    %v415 = vmax.f32 %v401, 0.0
    %v416 = vmax.f32 %v406, 0.0
    %v417 = vld [vmem:[#allocation2 + $0x100] sm:$0xff]
    %v418 = vld [vmem:[#allocation2 + $0x110] sm:$0xff]
    %v419 = vld [vmem:[#allocation2 + $0x108] sm:$0xff]
    %v420 = vld [vmem:[#allocation2 + $0x118] sm:$0xff]
    %422 = vset.pattern.permute.xlu0 0
    %423 = vperm.xlu0 %422, %v419
    %v424 = vpop.permute.xlu0 %423
    %427 = vset.pattern.permute.xlu0 0
    %428 = vperm.xlu0 %427, %v420
    %v429 = vpop.permute.xlu0 %428
    %v432 = vsel %vm279, %v417, 0
    %v435 = vsel %vm279, %v418, 0
    %437 = vmatprep.subr.mxu0 0.0
    %438 = vmatpush1.msra.mxu0 %v409
    %439 = vmatprep.subr.mxu0 0.0
    %440 = vmatpush1.msra.mxu0 %v410
    %441 = vmatprep.subr.mxu0 0.0
    %442 = vmatpush1.msra.mxu0 %v411
    %443 = vmatprep.subr.mxu0 0.0
    %444 = vmatpush1.msra.mxu0 %v412
    %445 = vmatprep.subr.mxu0 0.0
    %446 = vmatpush1.msra.mxu0 %v413
    %447 = vmatprep.subr.mxu0 0.0
    %448 = vmatpush1.msra.mxu0 %v414
    %449 = vmatprep.subr.mxu0 0.0
    %450 = vmatpush1.msra.mxu0 %v415
    %451 = vmatprep.subr.mxu0 0.0
    %452 = vmatpush1.msra.mxu0 %v416
    %453 = vmatprep.subr.mxu0 0.0
    %454 = vmatpush1.msra.mxu0 0.0
    %455 = vmatprep.subr.mxu0 0.0
    %456 = vmatpush1.msra.mxu0 0.0
    %457 = vmatprep.subr.mxu0 0.0
    %458 = vmatpush1.msra.mxu0 0.0
    %459 = vmatprep.subr.mxu0 0.0
    %460 = vmatpush1.msra.mxu0 0.0
    %461 = vmatprep.subr.mxu0 0.0
    %462 = vmatpush1.msra.mxu0 0.0
    %463 = vmatprep.subr.mxu0 0.0
    %464 = vmatpush1.msra.mxu0 0.0
    %465 = vmatprep.subr.mxu0 0.0
    %466 = vmatpush1.msra.mxu0 0.0
    %467 = vmatprep.subr.mxu0 0.0
    %468 = vmatpush1.msra.mxu0 0.0
    %469 = vmatprep.subr.mxu0 0.0
    %470 = vmatpush1.msra.mxu0 0.0
    %471 = vmatprep.subr.mxu0 0.0
    %472 = vmatpush1.msra.mxu0 0.0
    %473 = vmatprep.subr.mxu0 0.0
    %474 = vmatpush1.msra.mxu0 0.0
    %475 = vmatprep.subr.mxu0 0.0
    %476 = vmatpush1.msra.mxu0 0.0
    %477 = vmatprep.subr.mxu0 0.0
    %478 = vmatpush1.msra.mxu0 0.0
    %479 = vmatprep.subr.mxu0 0.0
    %480 = vmatpush1.msra.mxu0 0.0
    %481 = vmatprep.subr.mxu0 0.0
    %482 = vmatpush1.msra.mxu0 0.0
    %483 = vmatprep.subr.mxu0 0.0
    %484 = vmatpush1.msra.mxu0 0.0
    %485 = vmatprep.subr.mxu0 0.0
    %486 = vmatpush1.msra.mxu0 0.0
    %487 = vmatprep.subr.mxu0 0.0
    %488 = vmatpush1.msra.mxu0 0.0
    %489 = vmatprep.subr.mxu0 0.0
    %490 = vmatpush1.msra.mxu0 0.0
    %491 = vmatprep.subr.mxu0 0.0
    %492 = vmatpush1.msra.mxu0 0.0
    %493 = vmatprep.subr.mxu0 0.0
    %494 = vmatpush1.msra.mxu0 0.0
    %495 = vmatprep.subr.mxu0 0.0
    %496 = vmatpush1.msra.mxu0 0.0
    %497 = vmatprep.subr.mxu0 0.0
    %498 = vmatpush1.msra.mxu0 0.0
    %499 = vmatprep.subr.mxu0 0.0
    %500 = vmatpush1.msra.mxu0 0.0
    %501 = vmatprep.mubr.f32.mxu0 0.0
    %502 = vmatmul.mubr.f32.gmra.mrb[0].mxu0 %v432
    %v503 = vpop.f32.mrb[0].mxu0
    %v504 = vadd.f32 %v424, %v503
    %v505 = vpop.f32.mrb[0].mxu0
    %506 = vmatprep.mubr.f32.mxu0 0.0
    %507 = vmatmul.mubr.f32.gmra.mrb[0].mxu0 %v435
    %v508 = vpop.f32.mrb[0].mxu0
    %v509 = vadd.f32 %v429, %v508
    %v510 = vpop.f32.mrb[0].mxu0
    %511 = vdwg.mxu0
    %512 = vst [vmem:[%s2] sm:$0xff] %v504
    %513 = vst [vmem:[%s2 + $0x8] sm:$0xff] %v509
    // Predicated region
    $region14: #{_trajectory_head_forward.1} parent=1 // pred_check
      _
    $region15: #{_trajectory_head_forward.1} parent=1 // pred_check_branch
      %515 = sbr.rel (0) target = $region17
    $region16: #{_trajectory_head_forward.1} parent=1 // pred_region
      _
    $region17: #{_trajectory_head_forward.1} parent=1 // pred_fallthru
      _
    // Predicated region
    $region18: #{_trajectory_head_forward.1} parent=1 // pred_check
      _
    $region19: #{_trajectory_head_forward.1} parent=1 // pred_check_branch
      %517 = sbr.rel (0) target = $region21
    $region20: #{_trajectory_head_forward.1} parent=1 // pred_region
      _
    $region21: #{_trajectory_head_forward.1} parent=1 // pred_fallthru
      _
    %518 = vsyncpa [#allocation3], 1

</llo_original>
